<compile_context>
chip_gen: v6e
topology: v6e:2x2x1
jax: 0.10.0
libtpu: 0.0.40
codegen_flags: <defaults>
</compile_context>

<pallas_src>
import functools
import math

import jax
import jax.numpy as jnp
from jax import lax
from jax.experimental import pallas as pl
from jax.experimental.pallas import tpu as pltpu

LANE = 128     # vreg lane width
SUBLANE = 8    # vreg sublane depth (f32)


def _round_up(n, m):
    return ((n + m - 1) // m) * m


# ---------------------------------------------------------------------------
# Kernels
# ---------------------------------------------------------------------------

def _hidden_stack(x_ref, w1_ref, b1_ref, w2_ref, b2_ref):
    """relu(relu(x@W1+b1)@W2+b2) for one batch tile, f32 accumulation."""
    x = x_ref[...].astype(w1_ref.dtype)
    h = jnp.dot(x, w1_ref[...], preferred_element_type=jnp.float32)
    h = jnp.maximum(h + b1_ref[...], 0.0)
    h = jnp.dot(h.astype(w2_ref.dtype), w2_ref[...],
                preferred_element_type=jnp.float32)
    return jnp.maximum(h + b2_ref[...], 0.0)


def _mlp_kernel_tout(x_ref, w1_ref, b1_ref, w2_ref, b2_ref, wot_ref, bot_ref,
                     ot_ref):
    """Transposed-output variant: writes a lane-dense (Dout, tb) block."""
    h = _hidden_stack(x_ref, w1_ref, b1_ref, w2_ref, b2_ref)
    # y^T[d, b] = sum_k WoT[d, k] * h[b, k]   (contract last dims -> (Dout, tb))
    yt = lax.dot_general(wot_ref[...], h.astype(wot_ref.dtype),
                         dimension_numbers=(((1,), (1,)), ((), ())),
                         preferred_element_type=jnp.float32)
    ot_ref[...] = jax.nn.sigmoid(yt + bot_ref[...])


def _mlp_kernel(x_ref, w1_ref, b1_ref, w2_ref, b2_ref, wo_ref, bo_ref, o_ref):
    """Standard variant (Dout already lane-sized): writes a (tb, out_p) block."""
    h = _hidden_stack(x_ref, w1_ref, b1_ref, w2_ref, b2_ref)
    y = jnp.dot(h.astype(wo_ref.dtype), wo_ref[...],
                preferred_element_type=jnp.float32) + bo_ref[...]
    o_ref[...] = jax.nn.sigmoid(y)


# ---------------------------------------------------------------------------
# One-time parameter preparation (hoisted out of the per-call path)
# ---------------------------------------------------------------------------

def prepare_params(w1, b1, w2, b2, wo, bo, *, weight_dtype=jnp.bfloat16):
    """Pad / transpose / cast the weights ONCE; reuse across calls."""
    din, hidden = w1.shape
    dout = wo.shape[1]
    hid_p = _round_up(hidden, LANE)
    f32 = jnp.float32

    w1p = jnp.zeros((din, hid_p), f32).at[:, :hidden].set(w1).astype(weight_dtype)
    w2p = jnp.zeros((hid_p, hid_p), f32).at[:hidden, :hidden].set(w2).astype(weight_dtype)
    b1p = jnp.zeros((1, hid_p), f32).at[:, :hidden].set(jnp.reshape(b1, (1, -1)))
    b2p = jnp.zeros((1, hid_p), f32).at[:, :hidden].set(jnp.reshape(b2, (1, -1)))

    transpose_out = dout < LANE
    if transpose_out:
        # Output layer stored transposed (Dout, H) so the kernel can emit a
        # lane-dense (Dout, tb) block with the batch on lanes.
        wop = jnp.zeros((dout, hid_p), f32).at[:, :hidden].set(wo.T).astype(weight_dtype)
        bop = jnp.reshape(bo, (dout, 1)).astype(f32)
    else:
        out_p = _round_up(dout, LANE)
        wop = jnp.zeros((hid_p, out_p), f32).at[:hidden, :dout].set(wo).astype(weight_dtype)
        bop = jnp.zeros((1, out_p), f32).at[:, :dout].set(jnp.reshape(bo, (1, -1)))

    return {"arrays": (w1p, b1p, w2p, b2p, wop, bop),
            "transpose_out": transpose_out,
            "out_features": int(dout)}


def _pick_batch_tile(batch, block_batch):
    b8 = _round_up(batch, SUBLANE)
    if b8 <= block_batch and batch < 2 * 256:
        # Small / moderate batch: a single tile covering the whole batch.
        return b8, b8
    # Large batch: >=256-row tiles (fills v6e/v7x's 256-wide MXU), a multiple
    # of 128 (lane-dense transposed-output store), and >=2 grid steps so
    # v7x's second TensorCore has work.
    tb = min(block_batch, _round_up(pl.cdiv(batch, 2), 256))
    tb = max(256, (tb // 256) * 256)
    return tb, _round_up(batch, tb)


# ---------------------------------------------------------------------------
# Per-call forward
# ---------------------------------------------------------------------------

@functools.partial(jax.jit,
                   static_argnames=("transpose_out", "out_features",
                                    "block_batch"))
def mlp_forward(x, w1p, b1p, w2p, b2p, wop, bop, *, transpose_out,
                out_features, block_batch=512):
    """Pallas MLP forward.  x: [B, Din] f32.  Returns [B, Dout] f32."""
    batch, din = x.shape
    hid_p = w2p.shape[0]
    tb, b_p = _pick_batch_tile(batch, block_batch)
    if b_p != batch:
        x = jnp.pad(x, ((0, b_p - batch), (0, 0)))
    grid = (b_p // tb,)

    def resident(arr):
        # Same block at every grid step -> stays VMEM-resident across the grid.
        nblock = len(arr.shape)
        return pl.BlockSpec(arr.shape, lambda i, _n=nblock: (0,) * _n)

    in_specs = [
        # x streamed over the batch; feature dim left at its true size
        # (legal: last block dim == full array dim), so no lane-padding DMA.
        pl.BlockSpec((tb, din), lambda i: (i, 0)),
        resident(w1p), resident(b1p),
        resident(w2p), resident(b2p),
        resident(wop), resident(bop),
    ]

    if transpose_out:
        dout = wop.shape[0]
        out_shape = jax.ShapeDtypeStruct((dout, b_p), jnp.float32)
        out_spec = pl.BlockSpec((dout, tb), lambda i: (0, i))
        kernel = _mlp_kernel_tout
        out_tile_bytes = dout * tb * 4
    else:
        out_p = wop.shape[1]
        out_shape = jax.ShapeDtypeStruct((b_p, out_p), jnp.float32)
        out_spec = pl.BlockSpec((tb, out_p), lambda i: (i, 0))
        kernel = _mlp_kernel
        out_tile_bytes = tb * out_p * 4

    # Rough VMEM need: resident weights + double-buffered x/out tiles + temps.
    weight_bytes = sum(a.size * a.dtype.itemsize
                       for a in (w1p, b1p, w2p, b2p, wop, bop))
    est = weight_bytes + 2 * (tb * din * 4 + out_tile_bytes) + 4 * tb * hid_p * 4
    vmem_kw = {}
    if est > 16 * 1024 * 1024:
        # Keep an explicit, v7x-safe (64 MiB physical) scoped-VMEM limit when
        # block_batch is pushed to very large tiles.
        vmem_kw["vmem_limit_bytes"] = min(int(est * 3 // 2), 48 * 1024 * 1024)

    out = pl.pallas_call(
        kernel,
        out_shape=out_shape,
        grid=grid,
        in_specs=in_specs,
        out_specs=out_spec,
        compiler_params=pltpu.CompilerParams(
            dimension_semantics=("parallel",), **vmem_kw),
    )(x, w1p, b1p, w2p, b2p, wop, bop)

    if transpose_out:
        return out[:, :batch].T            # (Dout, B) -> (B, Dout)
    return out[:batch, :out_features]


def apply_mlp(params, x, **kwargs):
    return mlp_forward(x, *params["arrays"],
                       transpose_out=params["transpose_out"],
                       out_features=params["out_features"], **kwargs)


# ---------------------------------------------------------------------------
# Reference + init helpers
# ---------------------------------------------------------------------------

def init_linear(key, fan_in, fan_out):
    """Deterministic init matching torch.nn.Linear's U(-1/sqrt(fan_in), ...)."""
    kw, kb = jax.random.split(key)
    bound = 1.0 / math.sqrt(fan_in)
    w = jax.random.uniform(kw, (fan_in, fan_out), jnp.float32, -bound, bound)
    b = jax.random.uniform(kb, (1, fan_out), jnp.float32, -bound, bound)
    return w, b


def mlp_reference(x, w1, b1, w2, b2, wo, bo):
    h = jnp.maximum(x @ w1 + b1, 0.0)
    h = jnp.maximum(h @ w2 + b2, 0.0)
    return jax.nn.sigmoid(h @ wo + bo)


if __name__ == "__main__":
    # Shapes consistent with MLP(input_size=4, hidden_size=32, num_layers=2,
    # output_size=1).
    batch, input_size, hidden_size, output_size = 8, 4, 32, 1

    key = jax.random.PRNGKey(0)
    kx, k1, k2, k3 = jax.random.split(key, 4)

    x = jax.random.normal(kx, (batch, input_size), jnp.float32)
    w1, b1 = init_linear(k1, input_size, hidden_size)   # first_hidden_layer
    w2, b2 = init_linear(k2, hidden_size, hidden_size)  # rest_hidden_layers[0]
    wo, bo = init_linear(k3, hidden_size, output_size)  # output_layer

    ref = mlp_reference(x, w1, b1, w2, b2, wo, bo)

    # f32 resident weights: tight comparison against the f32 reference.
    p_f32 = prepare_params(w1, b1, w2, b2, wo, bo, weight_dtype=jnp.float32)
    out_f32 = jax.block_until_ready(apply_mlp(p_f32, x))
    assert out_f32.shape == (batch, output_size)
    assert jnp.allclose(out_f32, ref, atol=1e-5, rtol=1e-5)

    # bf16 resident weights (default): half the weight DMA/VMEM, f32 accumulation.
    p_bf16 = prepare_params(w1, b1, w2, b2, wo, bo)
    out_bf16 = jax.block_until_ready(apply_mlp(p_bf16, x))
    assert out_bf16.shape == (batch, output_size)
    assert jnp.allclose(out_bf16, ref, atol=2e-2, rtol=2e-2)

    # Larger batch: exercises the multi-tile path (>=2 grid steps, >=256-row
    # tiles, lane-dense (1, 512) output blocks) with the same cached params.
    big_batch = 640
    xb = jax.random.normal(kx, (big_batch, input_size), jnp.float32)
    refb = mlp_reference(xb, w1, b1, w2, b2, wo, bo)
    outb = jax.block_until_ready(apply_mlp(p_f32, xb))
    assert outb.shape == (big_batch, output_size)
    assert jnp.allclose(outb, refb, atol=1e-5, rtol=1e-5)

    print("KERNEL_OK")
</pallas_src>

<mosaic_0001>
module attributes {stable_mosaic.version = 11 : i64} {
  func.func @_mlp_kernel_tout(%arg0: i32, %arg1: memref<8x4xf32, #tpu.memory_space<vmem>>, %arg2: memref<4x128xf32, #tpu.memory_space<vmem>>, %arg3: memref<1x128xf32, #tpu.memory_space<vmem>>, %arg4: memref<128x128xf32, #tpu.memory_space<vmem>>, %arg5: memref<1x128xf32, #tpu.memory_space<vmem>>, %arg6: memref<1x128xf32, #tpu.memory_space<vmem>>, %arg7: memref<1x1xf32, #tpu.memory_space<vmem>>, %arg8: memref<1x8xf32, #tpu.memory_space<vmem>>) attributes {dimension_semantics = [#tpu.dimension_semantics<parallel>], iteration_bounds = array<i64: 1>, scalar_prefetch = 0 : i64, scratch_operands = 0 : i64, tpu.core_type = #tpu.core_type<tc>, window_params = [{transform_indices = @transform_0, window_bounds = array<i64: 8, 4>}, {pipeline_mode = #tpu.pipeline_mode<synchronous>, transform_indices = @transform_1, window_bounds = array<i64: 4, 128>}, {pipeline_mode = #tpu.pipeline_mode<synchronous>, transform_indices = @transform_2, window_bounds = array<i64: 1, 128>}, {pipeline_mode = #tpu.pipeline_mode<synchronous>, transform_indices = @transform_3, window_bounds = array<i64: 128, 128>}, {pipeline_mode = #tpu.pipeline_mode<synchronous>, transform_indices = @transform_4, window_bounds = array<i64: 1, 128>}, {pipeline_mode = #tpu.pipeline_mode<synchronous>, transform_indices = @transform_5, window_bounds = array<i64: 1, 128>}, {pipeline_mode = #tpu.pipeline_mode<synchronous>, transform_indices = @transform_6, window_bounds = array<i64: 1, 1>}, {transform_indices = @transform_7, window_bounds = array<i64: 1, 8>}]} {
    %c0 = arith.constant 0 : index
    %c0_0 = arith.constant 0 : index
    %0 = vector.load %arg1[%c0, %c0_0] : memref<8x4xf32, #tpu.memory_space<vmem>>, vector<8x4xf32>
    %c0_1 = arith.constant 0 : index
    %c0_2 = arith.constant 0 : index
    %1 = vector.load %arg2[%c0_1, %c0_2] : memref<4x128xf32, #tpu.memory_space<vmem>>, vector<4x128xf32>
    %cst = arith.constant dense<0.000000e+00> : vector<8x128xf32>
    %2 = tpu.matmul %0, %1, %cst {dimension_numbers = #tpu.dot_dimension_numbers<[1], [0], [0], [1], [0, 0, 1, 1], [], []>} : vector<8x4xf32>, vector<4x128xf32>, vector<8x128xf32> -> vector<8x128xf32>
    %c0_3 = arith.constant 0 : index
    %c0_4 = arith.constant 0 : index
    %3 = vector.load %arg3[%c0_3, %c0_4] : memref<1x128xf32, #tpu.memory_space<vmem>>, vector<1x128xf32>
    %4 = vector.broadcast %3 : vector<1x128xf32> to vector<8x128xf32>
    %5 = arith.addf %2, %4 : vector<8x128xf32>
    %cst_5 = arith.constant 0.000000e+00 : f32
    %6 = vector.broadcast %cst_5 : f32 to vector<8x128xf32>
    %7 = arith.maximumf %5, %6 : vector<8x128xf32>
    %c0_6 = arith.constant 0 : index
    %c0_7 = arith.constant 0 : index
    %8 = vector.load %arg4[%c0_6, %c0_7] : memref<128x128xf32, #tpu.memory_space<vmem>>, vector<128x128xf32>
    %cst_8 = arith.constant dense<0.000000e+00> : vector<8x128xf32>
    %9 = tpu.matmul %7, %8, %cst_8 {dimension_numbers = #tpu.dot_dimension_numbers<[1], [0], [0], [1], [0, 0, 1, 1], [], []>} : vector<8x128xf32>, vector<128x128xf32>, vector<8x128xf32> -> vector<8x128xf32>
    %c0_9 = arith.constant 0 : index
    %c0_10 = arith.constant 0 : index
    %10 = vector.load %arg5[%c0_9, %c0_10] : memref<1x128xf32, #tpu.memory_space<vmem>>, vector<1x128xf32>
    %11 = vector.broadcast %10 : vector<1x128xf32> to vector<8x128xf32>
    %12 = arith.addf %9, %11 : vector<8x128xf32>
    %cst_11 = arith.constant 0.000000e+00 : f32
    %13 = vector.broadcast %cst_11 : f32 to vector<8x128xf32>
    %14 = arith.maximumf %12, %13 : vector<8x128xf32>
    %c0_12 = arith.constant 0 : index
    %c0_13 = arith.constant 0 : index
    %15 = vector.load %arg6[%c0_12, %c0_13] : memref<1x128xf32, #tpu.memory_space<vmem>>, vector<1x128xf32>
    %cst_14 = arith.constant dense<0.000000e+00> : vector<1x8xf32>
    %16 = tpu.matmul %15, %14, %cst_14 {dimension_numbers = #tpu.dot_dimension_numbers<[1], [1], [0], [0], [0, 0, 1, 0], [], []>} : vector<1x128xf32>, vector<8x128xf32>, vector<1x8xf32> -> vector<1x8xf32>
    %c0_15 = arith.constant 0 : index
    %c0_16 = arith.constant 0 : index
    %17 = vector.load %arg7[%c0_15, %c0_16] : memref<1x1xf32, #tpu.memory_space<vmem>>, vector<1x1xf32>
    %18 = vector.broadcast %17 : vector<1x1xf32> to vector<1x8xf32>
    %19 = arith.addf %16, %18 : vector<1x8xf32>
    %20 = arith.negf %19 : vector<1x8xf32>
    %21 = math.exp %20 : vector<1x8xf32>
    %cst_17 = arith.constant 1.000000e+00 : f32
    %22 = vector.broadcast %cst_17 : f32 to vector<1x8xf32>
    %23 = arith.addf %22, %21 : vector<1x8xf32>
    %24 = arith.divf %22, %23 : vector<1x8xf32>
    %c0_18 = arith.constant 0 : index
    %c0_19 = arith.constant 0 : index
    %25 = vector.load %arg8[%c0_18, %c0_19] : memref<1x8xf32, #tpu.memory_space<vmem>>, vector<1x8xf32>
    tpu.vector_store %arg8[%c0_18, %c0_19], %24 {strides = array<i32>} : memref<1x8xf32, #tpu.memory_space<vmem>>, vector<1x8xf32>,
    return
  }
  func.func @transform_0(%arg0: i32) -> (i32, i32) {
    %c0_i32 = arith.constant 0 : i32
    %c0_i32_0 = arith.constant 0 : i32
    return %arg0, %c0_i32 : i32, i32
  }
  func.func @transform_1(%arg0: i32) -> (i32, i32) {
    %c0_i32 = arith.constant 0 : i32
    %c0_i32_0 = arith.constant 0 : i32
    %c0_i32_1 = arith.constant 0 : i32
    return %c0_i32, %c0_i32_0 : i32, i32
  }
  func.func @transform_2(%arg0: i32) -> (i32, i32) {
    %c0_i32 = arith.constant 0 : i32
    %c0_i32_0 = arith.constant 0 : i32
    %c0_i32_1 = arith.constant 0 : i32
    return %c0_i32, %c0_i32_0 : i32, i32
  }
  func.func @transform_3(%arg0: i32) -> (i32, i32) {
    %c0_i32 = arith.constant 0 : i32
    %c0_i32_0 = arith.constant 0 : i32
    %c0_i32_1 = arith.constant 0 : i32
    return %c0_i32, %c0_i32_0 : i32, i32
  }
  func.func @transform_4(%arg0: i32) -> (i32, i32) {
    %c0_i32 = arith.constant 0 : i32
    %c0_i32_0 = arith.constant 0 : i32
    %c0_i32_1 = arith.constant 0 : i32
    return %c0_i32, %c0_i32_0 : i32, i32
  }
  func.func @transform_5(%arg0: i32) -> (i32, i32) {
    %c0_i32 = arith.constant 0 : i32
    %c0_i32_0 = arith.constant 0 : i32
    %c0_i32_1 = arith.constant 0 : i32
    return %c0_i32, %c0_i32_0 : i32, i32
  }
  func.func @transform_6(%arg0: i32) -> (i32, i32) {
    %c0_i32 = arith.constant 0 : i32
    %c0_i32_0 = arith.constant 0 : i32
    %c0_i32_1 = arith.constant 0 : i32
    return %c0_i32, %c0_i32_0 : i32, i32
  }
  func.func @transform_7(%arg0: i32) -> (i32, i32) {
    %c0_i32 = arith.constant 0 : i32
    %c0_i32_0 = arith.constant 0 : i32
    return %c0_i32, %arg0 : i32, i32
  }
}

</mosaic_0001>

<llo_original>
// kernel: mlp_forward.1
$region0: #{mlp_forward.1}
  #allocation0 [shape = 'u32[]', space=smem, size = 0x4, offset = 0x4, fixed_abs, tag = 'smem constant byte address 0x4 - core index']
  #allocation1 [shape = 'u32[144,128]{1,0:T(1,128)}', space=vmem, size = 0x12000, scoped, tag = 'internal scratch']
  #allocation2 [shape = 'f32[1,1]{1,0:T(1,128)S(1)}', space=vmem, size = 0x200, scoped, tag = 'scoped memory for mlp_forward.1']
  %s0 = inlined_call_operand.vmem [shape: f32[8,4], index: 0, kind: input, shape index: {}]
  %s1 = inlined_call_operand.vmem [shape: f32[4,128], index: 1, kind: input, shape index: {}]
  %s2 = inlined_call_operand.vmem [shape: f32[1,128], index: 2, kind: input, shape index: {}]
  %s3 = inlined_call_operand.hbm [shape: f32[128,128], index: 3, kind: input, shape index: {}]
  %s4 = inlined_call_operand.vmem [shape: f32[1,128], index: 4, kind: input, shape index: {}]
  %s5 = inlined_call_operand.vmem [shape: f32[1,128], index: 5, kind: input, shape index: {}]
  %s6 = inlined_call_operand.<no memory space> [shape: f32[1,1], index: 6, kind: input, shape index: {}]
  %s7 = inlined_call_operand.hbm [shape: f32[1,8], index: 7, kind: output, shape index: {}]
  %s8 = sld [smem:[#allocation0]]
  $region42: #{mlp_forward.1} parent=0
    _
  %s10 = ssub.s32 1, %s8
  %s11 = scalar_select 0, %s10, %s8
  %v12 = vstv %s6
  %13 = vst [vmem:[#allocation2] sm:$0x1] %v12
  $region1: #{mlp_forward.1} parent=0
    #allocation3 [shape = 'u8[65536]{0}', space=vmem, size = 0x10000, scoped, tag = 'input window, operand 3, single buffered']
    #allocation4 [shape = 's32[1]{0}', space=sflag, size = 0x4, scoped, tag = 'scoped memory for mlp_forward.1']
    #allocation5 [shape = 's32[1]{0}', space=sflag, size = 0x4, scoped, tag = 'scoped memory for mlp_forward.1']
    #allocation6 [shape = 'u8[512]{0}', space=vmem, size = 0x400, scoped, tag = 'output window, operand 0, single buffered']
    %14 = vsyncpa [#allocation4], 0
    %15 = vsyncpa [#allocation5], 0
    // Predicated region
    $region2: #{mlp_forward.1} parent=1 // pred_check
      _
    $region3: #{mlp_forward.1} parent=1 // pred_check_branch
      %17 = sbr.rel (0) target = $region5
    $region4: #{mlp_forward.1} parent=1 // pred_region
      _
    $region5: #{mlp_forward.1} parent=1 // pred_fallthru
      _
    // Predicated region
    $region6: #{mlp_forward.1} parent=1 // pred_check
      _
    $region7: #{mlp_forward.1} parent=1 // pred_check_branch
      %19 = sbr.rel (0) target = $region9
    $region8: #{mlp_forward.1} parent=1 // pred_region
      _
    $region9: #{mlp_forward.1} parent=1 // pred_fallthru
      _
    // Predicated region
    $region10: #{mlp_forward.1} parent=1 // pred_check
      _
    $region11: #{mlp_forward.1} parent=1 // pred_check_branch
      %21 = sbr.rel (0) target = $region13
    $region12: #{mlp_forward.1} parent=1 // pred_region
      _
    $region13: #{mlp_forward.1} parent=1 // pred_fallthru
      _
    // Predicated region
    $region14: #{mlp_forward.1} parent=1 // pred_check
      _
    $region15: #{mlp_forward.1} parent=1 // pred_check_branch
      %23 = sbr.rel (0) target = $region17
    $region16: #{mlp_forward.1} parent=1 // pred_region
      %s25 = ssub.s32 2048, 2048
      %26 = vsyncadd [#allocation4], %s25
      %s27 = sshll.u32 [#allocation3], 4
      %s28 = int_to_ptr.vmem [resolvable:$true] %s27
      %33 = dma.hbm_to_vmem [thread:$0]  %s3, 2048, %s28, [#allocation4], 128, 128, 8
    $region17: #{mlp_forward.1} parent=1 // pred_fallthru
      _
    // Predicated region
    $region18: #{mlp_forward.1} parent=1 // pred_check
      _
    $region19: #{mlp_forward.1} parent=1 // pred_check_branch
      %35 = sbr.rel (0) target = $region21
    $region20: #{mlp_forward.1} parent=1 // pred_region
      _
    $region21: #{mlp_forward.1} parent=1 // pred_fallthru
      _
    // Predicated region
    $region22: #{mlp_forward.1} parent=1 // pred_check
      _
    $region23: #{mlp_forward.1} parent=1 // pred_check_branch
      %37 = sbr.rel (0) target = $region25
    $region24: #{mlp_forward.1} parent=1 // pred_region
      _
    $region25: #{mlp_forward.1} parent=1 // pred_fallthru
      _
    // Predicated region
    $region26: #{mlp_forward.1} parent=1 // pred_check
      _
    $region27: #{mlp_forward.1} parent=1 // pred_check_branch
      %39 = sbr.rel (0) target = $region29
    $region28: #{mlp_forward.1} parent=1 // pred_region
      _
    $region29: #{mlp_forward.1} parent=1 // pred_fallthru
      _
    // Predicated region
    $region30: #{mlp_forward.1} parent=1 // pred_check
      _
    $region31: #{mlp_forward.1} parent=1 // pred_check_branch
      %41 = sbr.rel (0) target = $region33
    $region32: #{mlp_forward.1} parent=1 // pred_region
      %42 = dma.done [#allocation4], 2048
    $region33: #{mlp_forward.1} parent=1 // pred_fallthru
      _
    %v43 = vld [vmem:[%s0] sm:$0xff]
    %v44 = vld [vmem:[%s1] sm:$0xf]
    %v45 = vld [vmem:[%s2] sm:$0x1]
    %v47 = vlaneseq
    %v48 = vshrl.u32 %v47, 7
    %v49 = vsub.s32 0, %v48
    %v50 = vrot.slane %v45, %v49
    %vm52 = vcmask 31744
    %v54 = vsel %vm52, %v43, 0
    %vm56 = vcmask 1043456
    %v58 = vsel %vm56, %v44, 0
    %60 = vmatprep.subr.mxu0 0.0
    %61 = vmatpush1.msra.mxu0 0.0
    %62 = vmatprep.subr.mxu0 0.0
    %63 = vmatpush1.msra.mxu0 0.0
    %64 = vmatprep.subr.mxu0 0.0
    %65 = vmatpush1.msra.mxu0 0.0
    %66 = vmatprep.subr.mxu0 0.0
    %67 = vmatpush1.msra.mxu0 0.0
    %68 = vmatprep.subr.mxu0 0.0
    %69 = vmatpush1.msra.mxu0 0.0
    %70 = vmatprep.subr.mxu0 0.0
    %71 = vmatpush1.msra.mxu0 0.0
    %72 = vmatprep.subr.mxu0 0.0
    %73 = vmatpush1.msra.mxu0 0.0
    %74 = vmatprep.subr.mxu0 0.0
    %75 = vmatpush1.msra.mxu0 0.0
    %76 = vmatprep.subr.mxu0 0.0
    %77 = vmatpush1.msra.mxu0 0.0
    %78 = vmatprep.subr.mxu0 0.0
    %79 = vmatpush1.msra.mxu0 0.0
    %80 = vmatprep.subr.mxu0 0.0
    %81 = vmatpush1.msra.mxu0 0.0
    %82 = vmatprep.subr.mxu0 0.0
    %83 = vmatpush1.msra.mxu0 0.0
    %84 = vmatprep.subr.mxu0 0.0
    %85 = vmatpush1.msra.mxu0 0.0
    %86 = vmatprep.subr.mxu0 0.0
    %87 = vmatpush1.msra.mxu0 0.0
    %88 = vmatprep.subr.mxu0 0.0
    %89 = vmatpush1.msra.mxu0 0.0
    %90 = vmatprep.subr.mxu0 0.0
    %91 = vmatpush1.msra.mxu0 %v58
    %92 = vmatprep.subr.mxu0 0.0
    %93 = vmatpush2.msra.mxu0 0.0
    %94 = vmatprep.subr.mxu0 0.0
    %95 = vmatpush2.msra.mxu0 0.0
    %96 = vmatprep.subr.mxu0 0.0
    %97 = vmatpush2.msra.mxu0 0.0
    %98 = vmatprep.subr.mxu0 0.0
    %99 = vmatpush2.msra.mxu0 0.0
    %100 = vmatprep.subr.mxu0 0.0
    %101 = vmatpush2.msra.mxu0 0.0
    %102 = vmatprep.subr.mxu0 0.0
    %103 = vmatpush2.msra.mxu0 0.0
    %104 = vmatprep.subr.mxu0 0.0
    %105 = vmatpush2.msra.mxu0 0.0
    %106 = vmatprep.subr.mxu0 0.0
    %107 = vmatpush2.msra.mxu0 0.0
    %108 = vmatprep.subr.mxu0 0.0
    %109 = vmatpush2.msra.mxu0 0.0
    %110 = vmatprep.subr.mxu0 0.0
    %111 = vmatpush2.msra.mxu0 0.0
    %112 = vmatprep.subr.mxu0 0.0
    %113 = vmatpush2.msra.mxu0 0.0
    %114 = vmatprep.subr.mxu0 0.0
    %115 = vmatpush2.msra.mxu0 0.0
    %116 = vmatprep.subr.mxu0 0.0
    %117 = vmatpush2.msra.mxu0 0.0
    %118 = vmatprep.subr.mxu0 0.0
    %119 = vmatpush2.msra.mxu0 0.0
    %120 = vmatprep.subr.mxu0 0.0
    %121 = vmatpush2.msra.mxu0 0.0
    %122 = vmatprep.subr.mxu0 0.0
    %123 = vmatpush2.msra.mxu0 0.0
    %124 = vmatprep.mubr.f32.mxu0 0.0
    %125 = vmatmul.mubr.f32.gmra.mxu0 %v54
    %v126 = vpop.f32.mrf.mxu0
    %v127 = vadd.f32 %v50, %v126
    %v128 = vpop.f32.mrf.mxu0
    %129 = vdwg.mxu0
    %v130 = vmax.f32 %v127, 0.0
    %v131 = vld [vmem:[#allocation3] sm:$0xff]
    %v132 = vld [vmem:[#allocation3 + $0x8] sm:$0xff]
    %v133 = vld [vmem:[#allocation3 + $0x10] sm:$0xff]
    %v134 = vld [vmem:[#allocation3 + $0x18] sm:$0xff]
    %v135 = vld [vmem:[#allocation3 + $0x20] sm:$0xff]
    %v136 = vld [vmem:[#allocation3 + $0x28] sm:$0xff]
    %v137 = vld [vmem:[#allocation3 + $0x30] sm:$0xff]
    %v138 = vld [vmem:[#allocation3 + $0x38] sm:$0xff]
    %v139 = vld [vmem:[#allocation3 + $0x40] sm:$0xff]
    %v140 = vld [vmem:[#allocation3 + $0x48] sm:$0xff]
    %v141 = vld [vmem:[#allocation3 + $0x50] sm:$0xff]
    %v142 = vld [vmem:[#allocation3 + $0x58] sm:$0xff]
    %v143 = vld [vmem:[#allocation3 + $0x60] sm:$0xff]
    %v144 = vld [vmem:[#allocation3 + $0x68] sm:$0xff]
    %v145 = vld [vmem:[#allocation3 + $0x70] sm:$0xff]
    %v146 = vld [vmem:[#allocation3 + $0x78] sm:$0xff]
    %v147 = vld [vmem:[%s4] sm:$0x1]
    %v149 = vlaneseq
    %v150 = vshrl.u32 %v149, 7
    %v151 = vsub.s32 0, %v150
    %v152 = vrot.slane %v147, %v151
    %154 = vmatprep.subr.mxu0 0.0
    %155 = vmatpush1.msra.mxu0 %v146
    %156 = vmatprep.subr.mxu0 0.0
    %157 = vmatpush1.msra.mxu0 %v145
    %158 = vmatprep.subr.mxu0 0.0
    %159 = vmatpush1.msra.mxu0 %v144
    %160 = vmatprep.subr.mxu0 0.0
    %161 = vmatpush1.msra.mxu0 %v143
    %162 = vmatprep.subr.mxu0 0.0
    %163 = vmatpush1.msra.mxu0 %v142
    %164 = vmatprep.subr.mxu0 0.0
    %165 = vmatpush1.msra.mxu0 %v141
    %166 = vmatprep.subr.mxu0 0.0
    %167 = vmatpush1.msra.mxu0 %v140
    %168 = vmatprep.subr.mxu0 0.0
    %169 = vmatpush1.msra.mxu0 %v139
    %170 = vmatprep.subr.mxu0 0.0
    %171 = vmatpush1.msra.mxu0 %v138
    %172 = vmatprep.subr.mxu0 0.0
    %173 = vmatpush1.msra.mxu0 %v137
    %174 = vmatprep.subr.mxu0 0.0
    %175 = vmatpush1.msra.mxu0 %v136
    %176 = vmatprep.subr.mxu0 0.0
    %177 = vmatpush1.msra.mxu0 %v135
    %178 = vmatprep.subr.mxu0 0.0
    %179 = vmatpush1.msra.mxu0 %v134
    %180 = vmatprep.subr.mxu0 0.0
    %181 = vmatpush1.msra.mxu0 %v133
    %182 = vmatprep.subr.mxu0 0.0
    %183 = vmatpush1.msra.mxu0 %v132
    %184 = vmatprep.subr.mxu0 0.0
    %185 = vmatpush1.msra.mxu0 %v131
    %186 = vmatprep.subr.mxu0 0.0
    %187 = vmatpush2.msra.mxu0 0.0
    %188 = vmatprep.subr.mxu0 0.0
    %189 = vmatpush2.msra.mxu0 0.0
    %190 = vmatprep.subr.mxu0 0.0
    %191 = vmatpush2.msra.mxu0 0.0
    %192 = vmatprep.subr.mxu0 0.0
    %193 = vmatpush2.msra.mxu0 0.0
    %194 = vmatprep.subr.mxu0 0.0
    %195 = vmatpush2.msra.mxu0 0.0
    %196 = vmatprep.subr.mxu0 0.0
    %197 = vmatpush2.msra.mxu0 0.0
    %198 = vmatprep.subr.mxu0 0.0
    %199 = vmatpush2.msra.mxu0 0.0
    %200 = vmatprep.subr.mxu0 0.0
    %201 = vmatpush2.msra.mxu0 0.0
    %202 = vmatprep.subr.mxu0 0.0
    %203 = vmatpush2.msra.mxu0 0.0
    %204 = vmatprep.subr.mxu0 0.0
    %205 = vmatpush2.msra.mxu0 0.0
    %206 = vmatprep.subr.mxu0 0.0
    %207 = vmatpush2.msra.mxu0 0.0
    %208 = vmatprep.subr.mxu0 0.0
    %209 = vmatpush2.msra.mxu0 0.0
    %210 = vmatprep.subr.mxu0 0.0
    %211 = vmatpush2.msra.mxu0 0.0
    %212 = vmatprep.subr.mxu0 0.0
    %213 = vmatpush2.msra.mxu0 0.0
    %214 = vmatprep.subr.mxu0 0.0
    %215 = vmatpush2.msra.mxu0 0.0
    %216 = vmatprep.subr.mxu0 0.0
    %217 = vmatpush2.msra.mxu0 0.0
    %218 = vmatprep.mubr.f32.mxu0 0.0
    %219 = vmatmul.mubr.f32.gmra.mxu0 %v130
    %v220 = vpop.f32.mrf.mxu0
    %v221 = vadd.f32 %v152, %v220
    %v222 = vpop.f32.mrf.mxu0
    %223 = vdwg.mxu0
    %v224 = vmax.f32 %v221, 0.0
    %v225 = vld [vmem:[%s5] sm:$0x1]
    %v226 = vld [vmem:[#allocation2] sm:$0x1]
    %228 = vset.pattern.permute.xlu0 0
    %229 = vperm.xlu0 %228, %v226
    %v230 = vpop.permute.xlu0 %229
    %v232 = vlaneseq
    %v233 = vshrl.u32 %v232, 7
    %v234 = vsub.s32 0, %v233
    %v235 = vrot.slane %v230, %v234
    %236 = vmatprep.subr.mxu0 0.0
    %237 = vmatpush1.xpose.msra.mxu0 0.0
    %238 = vmatprep.subr.mxu0 0.0
    %239 = vmatpush1.xpose.msra.mxu0 0.0
    %240 = vmatprep.subr.mxu0 0.0
    %241 = vmatpush1.xpose.msra.mxu0 0.0
    %242 = vmatprep.subr.mxu0 0.0
    %243 = vmatpush1.xpose.msra.mxu0 0.0
    %244 = vmatprep.subr.mxu0 0.0
    %245 = vmatpush1.xpose.msra.mxu0 0.0
    %246 = vmatprep.subr.mxu0 0.0
    %247 = vmatpush1.xpose.msra.mxu0 0.0
    %248 = vmatprep.subr.mxu0 0.0
    %249 = vmatpush1.xpose.msra.mxu0 0.0
    %250 = vmatprep.subr.mxu0 0.0
    %251 = vmatpush1.xpose.msra.mxu0 0.0
    %252 = vmatprep.subr.mxu0 0.0
    %253 = vmatpush1.xpose.msra.mxu0 0.0
    %254 = vmatprep.subr.mxu0 0.0
    %255 = vmatpush1.xpose.msra.mxu0 0.0
    %256 = vmatprep.subr.mxu0 0.0
    %257 = vmatpush1.xpose.msra.mxu0 0.0
    %258 = vmatprep.subr.mxu0 0.0
    %259 = vmatpush1.xpose.msra.mxu0 0.0
    %260 = vmatprep.subr.mxu0 0.0
    %261 = vmatpush1.xpose.msra.mxu0 0.0
    %262 = vmatprep.subr.mxu0 0.0
    %263 = vmatpush1.xpose.msra.mxu0 0.0
    %264 = vmatprep.subr.mxu0 0.0
    %265 = vmatpush1.xpose.msra.mxu0 0.0
    %266 = vmatprep.subr.mxu0 0.0
    %267 = vmatpush1.xpose.msra.mxu0 %v224
    %268 = vmatprep.subr.mxu0 0.0
    %269 = vmatpush2.xpose.msra.mxu0 0.0
    %270 = vmatprep.subr.mxu0 0.0
    %271 = vmatpush2.xpose.msra.mxu0 0.0
    %272 = vmatprep.subr.mxu0 0.0
    %273 = vmatpush2.xpose.msra.mxu0 0.0
    %274 = vmatprep.subr.mxu0 0.0
    %275 = vmatpush2.xpose.msra.mxu0 0.0
    %276 = vmatprep.subr.mxu0 0.0
    %277 = vmatpush2.xpose.msra.mxu0 0.0
    %278 = vmatprep.subr.mxu0 0.0
    %279 = vmatpush2.xpose.msra.mxu0 0.0
    %280 = vmatprep.subr.mxu0 0.0
    %281 = vmatpush2.xpose.msra.mxu0 0.0
    %282 = vmatprep.subr.mxu0 0.0
    %283 = vmatpush2.xpose.msra.mxu0 0.0
    %284 = vmatprep.subr.mxu0 0.0
    %285 = vmatpush2.xpose.msra.mxu0 0.0
    %286 = vmatprep.subr.mxu0 0.0
    %287 = vmatpush2.xpose.msra.mxu0 0.0
    %288 = vmatprep.subr.mxu0 0.0
    %289 = vmatpush2.xpose.msra.mxu0 0.0
    %290 = vmatprep.subr.mxu0 0.0
    %291 = vmatpush2.xpose.msra.mxu0 0.0
    %292 = vmatprep.subr.mxu0 0.0
    %293 = vmatpush2.xpose.msra.mxu0 0.0
    %294 = vmatprep.subr.mxu0 0.0
    %295 = vmatpush2.xpose.msra.mxu0 0.0
    %296 = vmatprep.subr.mxu0 0.0
    %297 = vmatpush2.xpose.msra.mxu0 0.0
    %298 = vmatprep.subr.mxu0 0.0
    %299 = vmatpush2.xpose.msra.mxu0 0.0
    %300 = vmatprep.mubr.f32.mxu0 0.0
    %301 = vmatmul.mubr.f32.gmra.mxu0 %v225
    %v302 = vpop.f32.mrf.mxu0
    %v303 = vadd.f32 %v235, %v302
    %v304 = vpop.f32.mrf.mxu0
    %305 = vdwg.mxu0
    %v306 = vxor.u32 %v303, 2147483648
    %v307 = vmul.f32 %v306, 1.442695
    %v308 = vpow.pop %v307
    %v309 = vadd.f32 %v308, 1.0
    %v310 = vrcp.pop %v309
    %v311 = vmul.f32 1.0, %v310
    %vm312 = vcmask 57344
    %313 = vst.msk [vmem:[#allocation6] sm:$0x1] %vm312, %v311
    // Predicated region
    $region34: #{mlp_forward.1} parent=1 // pred_check
      _
    $region35: #{mlp_forward.1} parent=1 // pred_check_branch
      %315 = sbr.rel (0) target = $region37
    $region36: #{mlp_forward.1} parent=1 // pred_region
      %s317 = ssub.s32 16, 16
      %318 = vsyncadd [#allocation5], %s317
      %s320 = sshll.u32 [#allocation6], 4
      %s321 = int_to_ptr.vmem [resolvable:$true] %s320
      %323 = dma.vmem_to_hbm [thread:$0]  %s321, 16, %s7, [#allocation5]
    $region37: #{mlp_forward.1} parent=1 // pred_fallthru
      _
    // Predicated region
    $region38: #{mlp_forward.1} parent=1 // pred_check
      _
    $region39: #{mlp_forward.1} parent=1 // pred_check_branch
      %325 = sbr.rel (0) target = $region41
    $region40: #{mlp_forward.1} parent=1 // pred_region
      %326 = dma.done [#allocation5], 16
    $region41: #{mlp_forward.1} parent=1 // pred_fallthru
      _
    %327 = vsyncpa [#allocation4], 1
    %328 = vsyncpa [#allocation5], 1

</llo_original>
